<compile_context>
chip_gen: v5e
topology: v5e:2x2
jax: 0.10.0
libtpu: 0.0.40
codegen_flags: <defaults>
</compile_context>

<pallas_src>
import jax
import jax.numpy as jnp
from jax.experimental import pallas as pl
from jax.experimental.pallas import tpu as pltpu


def _round_up(x, m):
    return ((x + m - 1) // m) * m


def actor_kernel(x_ref, w1_ref, b1_ref, w2_ref, b2_ref, w3_ref, b3_ref, out_ref):
    # Layer 1: Linear + ReLU. bf16 operands on the MXU, f32 accumulation.
    x = x_ref[...].astype(w1_ref.dtype)
    h = jnp.dot(x, w1_ref[...], preferred_element_type=jnp.float32)
    h = jnp.maximum(h + b1_ref[...], 0.0)
    # Layer 2: Linear + ReLU.
    h = jnp.dot(h.astype(w2_ref.dtype), w2_ref[...],
                preferred_element_type=jnp.float32)
    h = jnp.maximum(h + b2_ref[...], 0.0)
    # Output layer: Linear + tanh (tanh runs on the EUP, f32).
    o = jnp.dot(h.astype(w3_ref.dtype), w3_ref[...],
                preferred_element_type=jnp.float32)
    out_ref[...] = jnp.tanh(o + b3_ref[...]).astype(out_ref.dtype)


def _choose_tm(batch, *, max_tile_rows=4096):
    """Pick the batch tile size.

    - tiny batches (<512 rows): one tile (splitting only adds the ~0.35 us
      per-step pipeline overhead; a second TC can't pay for it at this size).
    - larger batches: an even number of tiles (>=2) so v7x's two TensorCores
      both get work and the megacore halves are balanced; each tile as large
      as possible but capped at max_tile_rows so the lane-padded VMEM working
      set (~3 KiB/row) stays ~12 MiB and per-step overhead stays <5%.
    """
    b8 = _round_up(batch, 8)           # sublane multiple
    if b8 < 512:
        return b8
    n_tiles = max(2, pl.cdiv(b8, max_tile_rows))
    n_tiles += n_tiles % 2             # even tile count -> balanced across 2 TCs
    return _round_up(pl.cdiv(b8, n_tiles), 8)


def actor_forward(x, params, *, matmul_dtype=jnp.bfloat16, max_tile_rows=4096):
    """Fused Actor forward pass, tiled over the batch dimension.

    x: (batch, state_size) float32. Weights (cast once to `matmul_dtype`) and
    biases stay resident in VMEM across all grid steps; x / out are streamed
    and double-buffered by the Pallas pipeline. Output is float32.
    """
    w1, b1, w2, b2, w3, b3 = params
    batch, state_size = x.shape
    h1 = w1.shape[1]
    h2 = w2.shape[1]
    action_size = w3.shape[1]

    # One-time, tiny casts (few tens of KiB total) of the weights for the MXU.
    w1m = w1.astype(matmul_dtype)
    w2m = w2.astype(matmul_dtype)
    w3m = w3.astype(matmul_dtype)

    tm = _choose_tm(batch, max_tile_rows=max_tile_rows)
    grid = (pl.cdiv(batch, tm),)       # ragged final block handled by Pallas masking

    def resident(arr):
        # Full-array block with a constant block index -> stays in VMEM.
        return pl.BlockSpec(arr.shape, lambda i: (0, 0))

    flops = 2 * batch * (state_size * h1 + h1 * h2 + h2 * action_size)
    bytes_accessed = (
        4 * batch * state_size                      # streamed x (f32)
        + 4 * batch * action_size                   # streamed out (f32)
        + 2 * (w1m.size + w2m.size + w3m.size)      # resident bf16 weights
        + 4 * (b1.size + b2.size + b3.size)         # resident f32 biases
    )
    cost = pl.CostEstimate(
        flops=flops,
        transcendentals=batch * action_size,        # tanh on the output
        bytes_accessed=int(bytes_accessed),
    )

    out = pl.pallas_call(
        actor_kernel,
        out_shape=jax.ShapeDtypeStruct((batch, action_size), jnp.float32),
        grid=grid,
        in_specs=[
            pl.BlockSpec((tm, state_size), lambda i: (i, 0)),  # x: streamed
            resident(w1m), resident(b1),
            resident(w2m), resident(b2),
            resident(w3m), resident(b3),
        ],
        out_specs=pl.BlockSpec((tm, action_size), lambda i: (i, 0)),
        compiler_params=pltpu.CompilerParams(
            dimension_semantics=("parallel",),      # shard batch tiles across TCs (v7x)
            vmem_limit_bytes=32 * 1024 * 1024,      # explicit budget; safe on v7x 64 MiB
        ),
        cost_estimate=cost,
    )(x, w1m, b1, w2m, b2, w3m, b3)
    return out


def init_actor_params(key, state_size, action_size, hidden_layers=(256, 128)):
    """Deterministic parameter init mirroring Actor.reset_parameters():
      - hidden Linear weights: uniform(-1/sqrt(out_features), 1/sqrt(out_features))
        (hidden_init uses weight.size()[0] == out_features)
      - output Linear weights: uniform(-3e-3, 3e-3)
      - all biases: PyTorch default uniform(-1/sqrt(in_features), 1/sqrt(in_features))
    Weights are stored transposed, shape (in, out). Stored in f32; the kernel
    wrapper casts them to bf16 for the MXU."""
    sizes = [state_size, *hidden_layers, action_size]
    keys = jax.random.split(key, 2 * (len(sizes) - 1))
    params = []
    for i, (s_in, s_out) in enumerate(zip(sizes[:-1], sizes[1:])):
        kw, kb = keys[2 * i], keys[2 * i + 1]
        if i < len(sizes) - 2:
            lim_w = 1.0 / jnp.sqrt(float(s_out))  # fan_in as defined by hidden_init
        else:
            lim_w = 3e-3
        w = jax.random.uniform(kw, (s_in, s_out), jnp.float32, -lim_w, lim_w)
        lim_b = 1.0 / jnp.sqrt(float(s_in))
        b = jax.random.uniform(kb, (1, s_out), jnp.float32, -lim_b, lim_b)
        params.extend([w, b])
    return tuple(params)


def actor_reference(x, params):
    """Pure-JAX f32 reference for correctness checking."""
    w1, b1, w2, b2, w3, b3 = params
    h = jnp.maximum(x @ w1 + b1, 0.0)
    h = jnp.maximum(h @ w2 + b2, 0.0)
    return jnp.tanh(h @ w3 + b3)


if __name__ == "__main__":
    state_size = 32
    action_size = 4
    hidden_layers = (64, 32)

    key = jax.random.PRNGKey(0)
    k_params, k_x1, k_x2, k_x3 = jax.random.split(key, 4)
    params = init_actor_params(k_params, state_size, action_size, hidden_layers)

    # bf16 matmul operands with f32 accumulation -> relaxed tolerance.
    ATOL = RTOL = 3e-2

    # 1) Small, module-consistent batch: single-tile path.
    x_small = jax.random.normal(k_x1, (8, state_size), dtype=jnp.float32)
    out_small = jax.block_until_ready(actor_forward(x_small, params))
    ref_small = actor_reference(x_small, params)
    assert out_small.shape == (8, action_size)
    assert jnp.allclose(out_small, ref_small, atol=ATOL, rtol=RTOL)

    # 2) Ragged batch (not a multiple of the tile): masked final block, no pad copy.
    x_ragged = jax.random.normal(k_x2, (200, state_size), dtype=jnp.float32)
    out_ragged = jax.block_until_ready(actor_forward(x_ragged, params))
    ref_ragged = actor_reference(x_ragged, params)
    assert out_ragged.shape == (200, action_size)
    assert jnp.allclose(out_ragged, ref_ragged, atol=ATOL, rtol=RTOL)

    # 3) Two-tile path: >=2 grid steps so v7x's second TensorCore gets work.
    x_big = jax.random.normal(k_x3, (1024, state_size), dtype=jnp.float32)
    out_big = jax.block_until_ready(actor_forward(x_big, params))
    ref_big = actor_reference(x_big, params)
    assert out_big.shape == (1024, action_size)
    assert jnp.allclose(out_big, ref_big, atol=ATOL, rtol=RTOL)

    print("KERNEL_OK")
</pallas_src>

<mosaic_0001>
module attributes {stable_mosaic.version = 11 : i64} {
  func.func @actor_kernel(%arg0: i32, %arg1: memref<8x32xf32, #tpu.memory_space<vmem>>, %arg2: memref<32x64xbf16, #tpu.memory_space<vmem>>, %arg3: memref<1x64xf32, #tpu.memory_space<vmem>>, %arg4: memref<64x32xbf16, #tpu.memory_space<vmem>>, %arg5: memref<1x32xf32, #tpu.memory_space<vmem>>, %arg6: memref<32x4xbf16, #tpu.memory_space<vmem>>, %arg7: memref<1x4xf32, #tpu.memory_space<vmem>>, %arg8: memref<8x4xf32, #tpu.memory_space<vmem>>) attributes {dimension_semantics = [#tpu.dimension_semantics<parallel>], iteration_bounds = array<i64: 1>, scalar_prefetch = 0 : i64, scratch_operands = 0 : i64, tpu.core_type = #tpu.core_type<tc>, window_params = [{transform_indices = @transform_0, window_bounds = array<i64: 8, 32>}, {pipeline_mode = #tpu.pipeline_mode<synchronous>, transform_indices = @transform_1, window_bounds = array<i64: 32, 64>}, {pipeline_mode = #tpu.pipeline_mode<synchronous>, transform_indices = @transform_2, window_bounds = array<i64: 1, 64>}, {pipeline_mode = #tpu.pipeline_mode<synchronous>, transform_indices = @transform_3, window_bounds = array<i64: 64, 32>}, {pipeline_mode = #tpu.pipeline_mode<synchronous>, transform_indices = @transform_4, window_bounds = array<i64: 1, 32>}, {pipeline_mode = #tpu.pipeline_mode<synchronous>, transform_indices = @transform_5, window_bounds = array<i64: 32, 4>}, {pipeline_mode = #tpu.pipeline_mode<synchronous>, transform_indices = @transform_6, window_bounds = array<i64: 1, 4>}, {transform_indices = @transform_7, window_bounds = array<i64: 8, 4>}]} {
    %c0 = arith.constant 0 : index
    %c0_0 = arith.constant 0 : index
    %0 = vector.load %arg1[%c0, %c0_0] : memref<8x32xf32, #tpu.memory_space<vmem>>, vector<8x32xf32>
    %1 = arith.truncf %0 : vector<8x32xf32> to vector<8x32xbf16>
    %c0_1 = arith.constant 0 : index
    %c0_2 = arith.constant 0 : index
    %2 = vector.load %arg2[%c0_1, %c0_2] : memref<32x64xbf16, #tpu.memory_space<vmem>>, vector<32x64xbf16>
    %cst = arith.constant dense<0.000000e+00> : vector<8x64xf32>
    %3 = tpu.matmul %1, %2, %cst {dimension_numbers = #tpu.dot_dimension_numbers<[1], [0], [0], [1], [0, 0, 1, 1], [], []>} : vector<8x32xbf16>, vector<32x64xbf16>, vector<8x64xf32> -> vector<8x64xf32>
    %c0_3 = arith.constant 0 : index
    %c0_4 = arith.constant 0 : index
    %4 = vector.load %arg3[%c0_3, %c0_4] : memref<1x64xf32, #tpu.memory_space<vmem>>, vector<1x64xf32>
    %5 = vector.broadcast %4 : vector<1x64xf32> to vector<8x64xf32>
    %6 = arith.addf %3, %5 : vector<8x64xf32>
    %cst_5 = arith.constant 0.000000e+00 : f32
    %7 = vector.broadcast %cst_5 : f32 to vector<8x64xf32>
    %8 = arith.maximumf %6, %7 : vector<8x64xf32>
    %9 = arith.truncf %8 : vector<8x64xf32> to vector<8x64xbf16>
    %c0_6 = arith.constant 0 : index
    %c0_7 = arith.constant 0 : index
    %10 = vector.load %arg4[%c0_6, %c0_7] : memref<64x32xbf16, #tpu.memory_space<vmem>>, vector<64x32xbf16>
    %cst_8 = arith.constant dense<0.000000e+00> : vector<8x32xf32>
    %11 = tpu.matmul %9, %10, %cst_8 {dimension_numbers = #tpu.dot_dimension_numbers<[1], [0], [0], [1], [0, 0, 1, 1], [], []>} : vector<8x64xbf16>, vector<64x32xbf16>, vector<8x32xf32> -> vector<8x32xf32>
    %c0_9 = arith.constant 0 : index
    %c0_10 = arith.constant 0 : index
    %12 = vector.load %arg5[%c0_9, %c0_10] : memref<1x32xf32, #tpu.memory_space<vmem>>, vector<1x32xf32>
    %13 = vector.broadcast %12 : vector<1x32xf32> to vector<8x32xf32>
    %14 = arith.addf %11, %13 : vector<8x32xf32>
    %cst_11 = arith.constant 0.000000e+00 : f32
    %15 = vector.broadcast %cst_11 : f32 to vector<8x32xf32>
    %16 = arith.maximumf %14, %15 : vector<8x32xf32>
    %17 = arith.truncf %16 : vector<8x32xf32> to vector<8x32xbf16>
    %c0_12 = arith.constant 0 : index
    %c0_13 = arith.constant 0 : index
    %18 = vector.load %arg6[%c0_12, %c0_13] : memref<32x4xbf16, #tpu.memory_space<vmem>>, vector<32x4xbf16>
    %cst_14 = arith.constant dense<0.000000e+00> : vector<8x4xf32>
    %19 = tpu.matmul %17, %18, %cst_14 {dimension_numbers = #tpu.dot_dimension_numbers<[1], [0], [0], [1], [0, 0, 1, 1], [], []>} : vector<8x32xbf16>, vector<32x4xbf16>, vector<8x4xf32> -> vector<8x4xf32>
    %c0_15 = arith.constant 0 : index
    %c0_16 = arith.constant 0 : index
    %20 = vector.load %arg7[%c0_15, %c0_16] : memref<1x4xf32, #tpu.memory_space<vmem>>, vector<1x4xf32>
    %21 = vector.broadcast %20 : vector<1x4xf32> to vector<8x4xf32>
    %22 = arith.addf %19, %21 : vector<8x4xf32>
    %23 = math.tanh %22 : vector<8x4xf32>
    %c0_17 = arith.constant 0 : index
    %c0_18 = arith.constant 0 : index
    %24 = vector.load %arg8[%c0_17, %c0_18] : memref<8x4xf32, #tpu.memory_space<vmem>>, vector<8x4xf32>
    tpu.vector_store %arg8[%c0_17, %c0_18], %23 {strides = array<i32>} : memref<8x4xf32, #tpu.memory_space<vmem>>, vector<8x4xf32>,
    return
  }
  func.func @transform_0(%arg0: i32) -> (i32, i32) {
    %c0_i32 = arith.constant 0 : i32
    %c0_i32_0 = arith.constant 0 : i32
    return %arg0, %c0_i32 : i32, i32
  }
  func.func @transform_1(%arg0: i32) -> (i32, i32) {
    %c0_i32 = arith.constant 0 : i32
    %c0_i32_0 = arith.constant 0 : i32
    %c0_i32_1 = arith.constant 0 : i32
    return %c0_i32, %c0_i32_0 : i32, i32
  }
  func.func @transform_2(%arg0: i32) -> (i32, i32) {
    %c0_i32 = arith.constant 0 : i32
    %c0_i32_0 = arith.constant 0 : i32
    %c0_i32_1 = arith.constant 0 : i32
    return %c0_i32, %c0_i32_0 : i32, i32
  }
  func.func @transform_3(%arg0: i32) -> (i32, i32) {
    %c0_i32 = arith.constant 0 : i32
    %c0_i32_0 = arith.constant 0 : i32
    %c0_i32_1 = arith.constant 0 : i32
    return %c0_i32, %c0_i32_0 : i32, i32
  }
  func.func @transform_4(%arg0: i32) -> (i32, i32) {
    %c0_i32 = arith.constant 0 : i32
    %c0_i32_0 = arith.constant 0 : i32
    %c0_i32_1 = arith.constant 0 : i32
    return %c0_i32, %c0_i32_0 : i32, i32
  }
  func.func @transform_5(%arg0: i32) -> (i32, i32) {
    %c0_i32 = arith.constant 0 : i32
    %c0_i32_0 = arith.constant 0 : i32
    %c0_i32_1 = arith.constant 0 : i32
    return %c0_i32, %c0_i32_0 : i32, i32
  }
  func.func @transform_6(%arg0: i32) -> (i32, i32) {
    %c0_i32 = arith.constant 0 : i32
    %c0_i32_0 = arith.constant 0 : i32
    %c0_i32_1 = arith.constant 0 : i32
    return %c0_i32, %c0_i32_0 : i32, i32
  }
  func.func @transform_7(%arg0: i32) -> (i32, i32) {
    %c0_i32 = arith.constant 0 : i32
    %c0_i32_0 = arith.constant 0 : i32
    return %arg0, %c0_i32 : i32, i32
  }
}

</mosaic_0001>

<llo_original>
// kernel: tpu_custom_call.1
$region0: #{tpu_custom_call.1}
  #allocation0 [shape = 'u32[]', space=smem, size = 0x4, offset = 0x4, fixed_abs, tag = 'smem constant byte address 0x4 - core index']
  #allocation1 [shape = 'u32[72,128]{1,0:T(1,128)}', space=vmem, size = 0x9000, scoped, tag = 'internal scratch']
  %s0 = inlined_call_operand.vmem [shape: f32[8,32], index: 0, kind: input, shape index: {}]
  %s1 = inlined_call_operand.vmem [shape: bf16[32,64], index: 1, kind: input, shape index: {}]
  %s2 = inlined_call_operand.vmem [shape: f32[1,64], index: 2, kind: input, shape index: {}]
  %s3 = inlined_call_operand.vmem [shape: bf16[64,32], index: 3, kind: input, shape index: {}]
  %s4 = inlined_call_operand.vmem [shape: f32[1,32], index: 4, kind: input, shape index: {}]
  %s5 = inlined_call_operand.vmem [shape: bf16[32,4], index: 5, kind: input, shape index: {}]
  %s6 = inlined_call_operand.vmem [shape: f32[1,4], index: 6, kind: input, shape index: {}]
  %s7 = inlined_call_operand.vmem [shape: f32[8,4], index: 7, kind: output, shape index: {}]
  %s8 = sld [smem:[#allocation0]]
  $region38: #{tpu_custom_call.1} parent=0
    _
  %s10 = ssub.s32 1, %s8
  %s11 = scalar_select 0, %s10, %s8
  // Predicated region
  $region2: #{tpu_custom_call.1} parent=0 // pred_check
    _
  $region3: #{tpu_custom_call.1} parent=0 // pred_check_branch
    %13 = sbr.rel (0) target = $region5
  $region4: #{tpu_custom_call.1} parent=0 // pred_region
    _
  $region5: #{tpu_custom_call.1} parent=0 // pred_fallthru
    _
  // Predicated region
  $region6: #{tpu_custom_call.1} parent=0 // pred_check
    _
  $region7: #{tpu_custom_call.1} parent=0 // pred_check_branch
    %15 = sbr.rel (0) target = $region9
  $region8: #{tpu_custom_call.1} parent=0 // pred_region
    _
  $region9: #{tpu_custom_call.1} parent=0 // pred_fallthru
    _
  // Predicated region
  $region10: #{tpu_custom_call.1} parent=0 // pred_check
    _
  $region11: #{tpu_custom_call.1} parent=0 // pred_check_branch
    %17 = sbr.rel (0) target = $region13
  $region12: #{tpu_custom_call.1} parent=0 // pred_region
    _
  $region13: #{tpu_custom_call.1} parent=0 // pred_fallthru
    _
  // Predicated region
  $region14: #{tpu_custom_call.1} parent=0 // pred_check
    _
  $region15: #{tpu_custom_call.1} parent=0 // pred_check_branch
    %19 = sbr.rel (0) target = $region17
  $region16: #{tpu_custom_call.1} parent=0 // pred_region
    _
  $region17: #{tpu_custom_call.1} parent=0 // pred_fallthru
    _
  // Predicated region
  $region18: #{tpu_custom_call.1} parent=0 // pred_check
    _
  $region19: #{tpu_custom_call.1} parent=0 // pred_check_branch
    %21 = sbr.rel (0) target = $region21
  $region20: #{tpu_custom_call.1} parent=0 // pred_region
    _
  $region21: #{tpu_custom_call.1} parent=0 // pred_fallthru
    _
  // Predicated region
  $region22: #{tpu_custom_call.1} parent=0 // pred_check
    _
  $region23: #{tpu_custom_call.1} parent=0 // pred_check_branch
    %23 = sbr.rel (0) target = $region25
  $region24: #{tpu_custom_call.1} parent=0 // pred_region
    _
  $region25: #{tpu_custom_call.1} parent=0 // pred_fallthru
    _
  // Predicated region
  $region26: #{tpu_custom_call.1} parent=0 // pred_check
    _
  $region27: #{tpu_custom_call.1} parent=0 // pred_check_branch
    %25 = sbr.rel (0) target = $region29
  $region28: #{tpu_custom_call.1} parent=0 // pred_region
    _
  $region29: #{tpu_custom_call.1} parent=0 // pred_fallthru
    _
  %v27 = vld [vmem:[%s0] sm:$0xff]
  %v28 = vpack.c.bf16 %v27, %v27
  %v29 = vld [vmem:[%s1] sm:$0xf]
  %v30 = vld [vmem:[%s1 + $0x4] sm:$0xf]
  %v31 = vld [vmem:[%s1 + $0x8] sm:$0xf]
  %v32 = vld [vmem:[%s1 + $0xc] sm:$0xf]
  %v33 = vld [vmem:[%s2] sm:$0x1]
  %v35 = vperm.slane %v33, 0
  %v41 = vunpack.c.l.b16 %v29
  %v42 = vunpack.c.l.b16 %v30
  %v43 = vunpack.c.l.b16 %v31
  %v44 = vunpack.c.l.b16 %v32
  %v45 = vpack.c.b16 %v42, %v41
  %v46 = vpack.c.b16 %v44, %v43
  %vm49 = vcmask 261120
  %v51 = vsel %vm49, %v28, 0
  %53 = vmatpush.bf16.msra.mxu0 0
  %54 = vmatpush.bf16.msra.mxu0 0
  %55 = vmatpush.bf16.msra.mxu0 0
  %56 = vmatpush.bf16.msra.mxu0 0
  %57 = vmatpush.bf16.msra.mxu0 0
  %58 = vmatpush.bf16.msra.mxu0 0
  %59 = vmatpush.bf16.msra.mxu0 %v46
  %60 = vmatpush.bf16.msra.mxu0 %v45
  %61 = vmatmul.bf16.gmra.mxu0 %v51
  %v62 = vpop.f32.mrf.mxu0
  %v63 = vadd.f32 %v35, %v62
  %v64 = vpop.f32.mrf.mxu0
  %65 = vdwg.mxu0
  %v66 = vmax.f32 %v63, 0.0
  %v67 = vpack.c.bf16 %v66, %v66
  %v68 = vld [vmem:[%s3] sm:$0xf]
  %v69 = vld [vmem:[%s3 + $0x4] sm:$0xf]
  %v70 = vld [vmem:[%s3 + $0x8] sm:$0xf]
  %v71 = vld [vmem:[%s3 + $0xc] sm:$0xf]
  %v72 = vld [vmem:[%s3 + $0x10] sm:$0xf]
  %v73 = vld [vmem:[%s3 + $0x14] sm:$0xf]
  %v74 = vld [vmem:[%s3 + $0x18] sm:$0xf]
  %v75 = vld [vmem:[%s3 + $0x1c] sm:$0xf]
  %v76 = vld [vmem:[%s4] sm:$0x1]
  %v78 = vperm.slane %v76, 0
  %v88 = vunpack.c.l.b16 %v68
  %v89 = vunpack.c.l.b16 %v69
  %v90 = vunpack.c.l.b16 %v70
  %v91 = vunpack.c.l.b16 %v71
  %v92 = vunpack.c.l.b16 %v72
  %v93 = vunpack.c.l.b16 %v73
  %v94 = vunpack.c.l.b16 %v74
  %v95 = vunpack.c.l.b16 %v75
  %v96 = vpack.c.b16 %v89, %v88
  %v97 = vpack.c.b16 %v91, %v90
  %v98 = vpack.c.b16 %v93, %v92
  %v99 = vpack.c.b16 %v95, %v94
  %vm104 = vcmask 523264
  %v106 = vsel %vm104, %v67, 0
  %108 = vmatpush.bf16.msra.mxu0 0
  %109 = vmatpush.bf16.msra.mxu0 0
  %110 = vmatpush.bf16.msra.mxu0 0
  %111 = vmatpush.bf16.msra.mxu0 0
  %112 = vmatpush.bf16.msra.mxu0 %v99
  %113 = vmatpush.bf16.msra.mxu0 %v98
  %114 = vmatpush.bf16.msra.mxu0 %v97
  %115 = vmatpush.bf16.msra.mxu0 %v96
  %116 = vmatmul.bf16.gmra.mxu0 %v106
  %v117 = vpop.f32.mrf.mxu0
  %v118 = vadd.f32 %v78, %v117
  %v119 = vpop.f32.mrf.mxu0
  %120 = vdwg.mxu0
  %v121 = vmax.f32 %v118, 0.0
  %v122 = vpack.c.bf16 %v121, %v121
  %v123 = vld [vmem:[%s5] sm:$0xf]
  %v124 = vld [vmem:[%s5 + $0x4] sm:$0xf]
  %v125 = vld [vmem:[%s5 + $0x8] sm:$0xf]
  %v126 = vld [vmem:[%s5 + $0xc] sm:$0xf]
  %v127 = vld [vmem:[%s6] sm:$0x1]
  %v129 = vperm.slane %v127, 0
  %v135 = vunpack.c.l.b16 %v123
  %v136 = vunpack.c.l.b16 %v124
  %v137 = vunpack.c.l.b16 %v125
  %v138 = vunpack.c.l.b16 %v126
  %v139 = vpack.c.b16 %v136, %v135
  %v140 = vpack.c.b16 %v138, %v137
  %v144 = vsel %vm49, %v122, 0
  %146 = vmatpush.bf16.msra.mxu0 0
  %147 = vmatpush.bf16.msra.mxu0 0
  %148 = vmatpush.bf16.msra.mxu0 0
  %149 = vmatpush.bf16.msra.mxu0 0
  %150 = vmatpush.bf16.msra.mxu0 0
  %151 = vmatpush.bf16.msra.mxu0 0
  %152 = vmatpush.bf16.msra.mxu0 %v140
  %153 = vmatpush.bf16.msra.mxu0 %v139
  %154 = vmatmul.bf16.gmra.mxu0 %v144
  %v155 = vpop.f32.mrf.mxu0
  %v156 = vadd.f32 %v129, %v155
  %v157 = vpop.f32.mrf.mxu0
  %158 = vdwg.mxu0
  %v159 = vtanh.pop %v156
  %vm160 = vcmask 31744
  %161 = vst.msk [vmem:[%s7] sm:$0xff] %vm160, %v159
  // Predicated region
  $region30: #{tpu_custom_call.1} parent=0 // pred_check
    _
  $region31: #{tpu_custom_call.1} parent=0 // pred_check_branch
    %163 = sbr.rel (0) target = $region33
  $region32: #{tpu_custom_call.1} parent=0 // pred_region
    _
  $region33: #{tpu_custom_call.1} parent=0 // pred_fallthru
    _
  // Predicated region
  $region34: #{tpu_custom_call.1} parent=0 // pred_check
    _
  $region35: #{tpu_custom_call.1} parent=0 // pred_check_branch
    %165 = sbr.rel (0) target = $region37
  $region36: #{tpu_custom_call.1} parent=0 // pred_region
    _
  $region37: #{tpu_custom_call.1} parent=0 // pred_fallthru
    _

</llo_original>
